<compile_context>
chip_gen: v7x
topology: tpu7x:2x2x1
jax: 0.10.0
libtpu: 0.0.40
codegen_flags: <defaults>
</compile_context>

<pallas_src>
import jax
import jax.numpy as jnp
from jax.experimental import pallas as pl
from jax.experimental.pallas import tpu as pltpu


def fc_pooling_kernel(x_ref, w1_ref, b1_ref, w2_ref, b2_ref, w3_ref, b3_ref, o_ref):
    # In-kernel cast: f32 x crosses HBM once; bf16 feeds the MXU.
    x = x_ref[...].astype(jnp.bfloat16)                               # (bm, 1024)

    # layer1 -> ReLU  (dropout == identity in eval mode)
    h1 = jnp.dot(x, w1_ref[...], preferred_element_type=jnp.float32) + b1_ref[...]
    h1 = jnp.maximum(h1, 0.0).astype(jnp.bfloat16)                    # (bm, 256)

    # layer2 -> ReLU
    h2 = jnp.dot(h1, w2_ref[...], preferred_element_type=jnp.float32) + b2_ref[...]
    h2 = jnp.maximum(h2, 0.0).astype(jnp.bfloat16)                    # (bm, 64)

    # layer3 -> ReLU -> softmax over last dim (16 classes)
    h3 = jnp.dot(h2, w3_ref[...], preferred_element_type=jnp.float32) + b3_ref[...]
    h3 = jnp.maximum(h3, 0.0)                                         # (bm, 16) f32

    m = jnp.max(h3, axis=-1, keepdims=True)
    e = jnp.exp(h3 - m)
    inv = pl.reciprocal(jnp.sum(e, axis=-1, keepdims=True), approx=True)
    o_ref[...] = (e * inv).astype(o_ref.dtype)


def _round_up(x, m):
    return ((x + m - 1) // m) * m


def _round_down(x, m):
    return (x // m) * m


def _choose_bm(B, bm_max=2048):
    """Pick the batch tile: big enough to amortize per-step overhead, but with
    >= 2 grid steps when B >= 256 so v7x's two TensorCores both get work."""
    if B <= 128:
        # Tiny batch: one exact tile (8-row granularity; x block is f32 so the
        # bf16 16-row packing concern does not apply to the DMA'd block).
        return max(8, _round_up(B, 8))
    bm = min(bm_max, _round_up(B, 128))
    if B >= 256:
        half = max(128, _round_down(_round_up(B, 128) // 2, 128))
        bm = min(bm, half)
    return bm


def prepare_params(w1, b1, w2, b2, w3, b3):
    """One-time prep: bf16 weights (MXU-native, half the weight DMA bytes),
    f32 biases.  Do this once, outside the per-call path."""
    return (w1.astype(jnp.bfloat16), b1,
            w2.astype(jnp.bfloat16), b2,
            w3.astype(jnp.bfloat16), b3)


def fc_pooling(x, w1b, b1, w2b, b2, w3b, b3, *, bm=2048):
    """x: (B, 1024) f32.  Weights wNb: (in, out) bf16 (see prepare_params),
    biases bN: (1, out) f32.  Returns (B, 16) f32 softmax probabilities."""
    B, D_in = x.shape
    assert D_in == 1024
    D_out = w3b.shape[1]

    bm = _choose_bm(B, bm)
    grid = (pl.cdiv(B, bm),)
    full = lambda shape: pl.BlockSpec(shape, lambda i: (0, 0))

    flops = 2 * B * (1024 * 256 + 256 * 64 + 64 * 16)
    bytes_accessed = (
        B * 1024 * 4                                    # x (f32, read once)
        + (1024 * 256 + 256 * 64 + 64 * 16) * 2         # weights (bf16)
        + (256 + 64 + 16) * 4                           # biases (f32)
        + B * D_out * 4                                 # output (f32)
    )
    cost = pl.CostEstimate(flops=flops,
                           transcendentals=B * (D_out + 1),
                           bytes_accessed=bytes_accessed)

    return pl.pallas_call(
        fc_pooling_kernel,
        out_shape=jax.ShapeDtypeStruct((B, D_out), jnp.float32),
        grid_spec=pltpu.PrefetchScalarGridSpec(
            num_scalar_prefetch=0,
            grid=grid,
            in_specs=[
                pl.BlockSpec((bm, 1024), lambda i: (i, 0)),   # x tile (f32)
                full(w1b.shape), full(b1.shape),
                full(w2b.shape), full(b2.shape),
                full(w3b.shape), full(b3.shape),
            ],
            out_specs=pl.BlockSpec((bm, D_out), lambda i: (i, 0)),
        ),
        compiler_params=pltpu.CompilerParams(
            dimension_semantics=("parallel",),
            vmem_limit_bytes=32 * 1024 * 1024,
        ),
        cost_estimate=cost,
    )(x, w1b, b1, w2b, b2, w3b, b3)


def _init_linear(key, fan_in, fan_out):
    # Deterministic synthetic init mimicking nn.Linear's U(-1/sqrt(fan_in), ...)
    kw, kb = jax.random.split(key)
    bound = 1.0 / jnp.sqrt(fan_in)
    w = jax.random.uniform(kw, (fan_in, fan_out), jnp.float32, -bound, bound)
    b = jax.random.uniform(kb, (1, fan_out), jnp.float32, -bound, bound)
    return w, b


def reference(x, w1, b1, w2, b2, w3, b3):
    h1 = jax.nn.relu(x @ w1 + b1)
    h2 = jax.nn.relu(h1 @ w2 + b2)
    h3 = jax.nn.relu(h2 @ w3 + b3)
    return jax.nn.softmax(h3, axis=-1)


if __name__ == "__main__":
    key = jax.random.PRNGKey(0)
    kx, k1, k2, k3 = jax.random.split(key, 4)

    # Small, module-consistent shapes: feature dim fixed at 1024 by layer1.
    B = 16
    x = jax.random.normal(kx, (B, 1024), jnp.float32)
    w1, b1 = _init_linear(k1, 1024, 256)
    w2, b2 = _init_linear(k2, 256, 64)
    w3, b3 = _init_linear(k3, 64, 16)

    # TODO(synk): nn.Dropout(p=0.5) is identity in eval mode; no RNG masking emitted.
    params = prepare_params(w1, b1, w2, b2, w3, b3)   # bf16 weights, cast once
    out = fc_pooling(x, *params)
    out = jax.block_until_ready(out)

    ref = reference(x, w1, b1, w2, b2, w3, b3)
    assert out.shape == (B, 16)
    # bf16 matmul inputs + approx reciprocal => loosened tolerance vs f32 ref.
    assert jnp.allclose(out, ref, atol=2e-2, rtol=2e-2), "mismatch vs reference"

    print("KERNEL_OK")
</pallas_src>

<mosaic_0001>
module attributes {stable_mosaic.version = 11 : i64} {
  func.func @fc_pooling_kernel(%arg0: i32, %arg1: memref<16x1024xf32, #tpu.memory_space<vmem>>, %arg2: memref<1024x256xbf16, #tpu.memory_space<vmem>>, %arg3: memref<1x256xf32, #tpu.memory_space<vmem>>, %arg4: memref<256x64xbf16, #tpu.memory_space<vmem>>, %arg5: memref<1x64xf32, #tpu.memory_space<vmem>>, %arg6: memref<64x16xbf16, #tpu.memory_space<vmem>>, %arg7: memref<1x16xf32, #tpu.memory_space<vmem>>, %arg8: memref<16x16xf32, #tpu.memory_space<vmem>>) attributes {dimension_semantics = [#tpu.dimension_semantics<parallel>], iteration_bounds = array<i64: 1>, scalar_prefetch = 0 : i64, scratch_operands = 0 : i64, tpu.core_type = #tpu.core_type<tc>, window_params = [{transform_indices = @transform_0, window_bounds = array<i64: 16, 1024>}, {pipeline_mode = #tpu.pipeline_mode<synchronous>, transform_indices = @transform_1, window_bounds = array<i64: 1024, 256>}, {pipeline_mode = #tpu.pipeline_mode<synchronous>, transform_indices = @transform_2, window_bounds = array<i64: 1, 256>}, {pipeline_mode = #tpu.pipeline_mode<synchronous>, transform_indices = @transform_3, window_bounds = array<i64: 256, 64>}, {pipeline_mode = #tpu.pipeline_mode<synchronous>, transform_indices = @transform_4, window_bounds = array<i64: 1, 64>}, {pipeline_mode = #tpu.pipeline_mode<synchronous>, transform_indices = @transform_5, window_bounds = array<i64: 64, 16>}, {pipeline_mode = #tpu.pipeline_mode<synchronous>, transform_indices = @transform_6, window_bounds = array<i64: 1, 16>}, {transform_indices = @transform_7, window_bounds = array<i64: 16, 16>}]} {
    %c0 = arith.constant 0 : index
    %c0_0 = arith.constant 0 : index
    %0 = vector.load %arg1[%c0, %c0_0] : memref<16x1024xf32, #tpu.memory_space<vmem>>, vector<16x1024xf32>
    %1 = arith.truncf %0 : vector<16x1024xf32> to vector<16x1024xbf16>
    %c0_1 = arith.constant 0 : index
    %c0_2 = arith.constant 0 : index
    %2 = vector.load %arg2[%c0_1, %c0_2] : memref<1024x256xbf16, #tpu.memory_space<vmem>>, vector<1024x256xbf16>
    %cst = arith.constant dense<0.000000e+00> : vector<16x256xf32>
    %3 = tpu.matmul %1, %2, %cst {dimension_numbers = #tpu.dot_dimension_numbers<[1], [0], [0], [1], [0, 0, 1, 1], [], []>} : vector<16x1024xbf16>, vector<1024x256xbf16>, vector<16x256xf32> -> vector<16x256xf32>
    %c0_3 = arith.constant 0 : index
    %c0_4 = arith.constant 0 : index
    %4 = vector.load %arg3[%c0_3, %c0_4] : memref<1x256xf32, #tpu.memory_space<vmem>>, vector<1x256xf32>
    %5 = vector.broadcast %4 : vector<1x256xf32> to vector<16x256xf32>
    %6 = arith.addf %3, %5 : vector<16x256xf32>
    %cst_5 = arith.constant 0.000000e+00 : f32
    %7 = vector.broadcast %cst_5 : f32 to vector<16x256xf32>
    %8 = arith.maximumf %6, %7 : vector<16x256xf32>
    %9 = arith.truncf %8 : vector<16x256xf32> to vector<16x256xbf16>
    %c0_6 = arith.constant 0 : index
    %c0_7 = arith.constant 0 : index
    %10 = vector.load %arg4[%c0_6, %c0_7] : memref<256x64xbf16, #tpu.memory_space<vmem>>, vector<256x64xbf16>
    %cst_8 = arith.constant dense<0.000000e+00> : vector<16x64xf32>
    %11 = tpu.matmul %9, %10, %cst_8 {dimension_numbers = #tpu.dot_dimension_numbers<[1], [0], [0], [1], [0, 0, 1, 1], [], []>} : vector<16x256xbf16>, vector<256x64xbf16>, vector<16x64xf32> -> vector<16x64xf32>
    %c0_9 = arith.constant 0 : index
    %c0_10 = arith.constant 0 : index
    %12 = vector.load %arg5[%c0_9, %c0_10] : memref<1x64xf32, #tpu.memory_space<vmem>>, vector<1x64xf32>
    %13 = vector.broadcast %12 : vector<1x64xf32> to vector<16x64xf32>
    %14 = arith.addf %11, %13 : vector<16x64xf32>
    %cst_11 = arith.constant 0.000000e+00 : f32
    %15 = vector.broadcast %cst_11 : f32 to vector<16x64xf32>
    %16 = arith.maximumf %14, %15 : vector<16x64xf32>
    %17 = arith.truncf %16 : vector<16x64xf32> to vector<16x64xbf16>
    %c0_12 = arith.constant 0 : index
    %c0_13 = arith.constant 0 : index
    %18 = vector.load %arg6[%c0_12, %c0_13] : memref<64x16xbf16, #tpu.memory_space<vmem>>, vector<64x16xbf16>
    %cst_14 = arith.constant dense<0.000000e+00> : vector<16x16xf32>
    %19 = tpu.matmul %17, %18, %cst_14 {dimension_numbers = #tpu.dot_dimension_numbers<[1], [0], [0], [1], [0, 0, 1, 1], [], []>} : vector<16x64xbf16>, vector<64x16xbf16>, vector<16x16xf32> -> vector<16x16xf32>
    %c0_15 = arith.constant 0 : index
    %c0_16 = arith.constant 0 : index
    %20 = vector.load %arg7[%c0_15, %c0_16] : memref<1x16xf32, #tpu.memory_space<vmem>>, vector<1x16xf32>
    %21 = vector.broadcast %20 : vector<1x16xf32> to vector<16x16xf32>
    %22 = arith.addf %19, %21 : vector<16x16xf32>
    %cst_17 = arith.constant 0.000000e+00 : f32
    %23 = vector.broadcast %cst_17 : f32 to vector<16x16xf32>
    %24 = arith.maximumf %22, %23 : vector<16x16xf32>
    %cst_18 = arith.constant dense<0xFF800000> : vector<16xf32>
    %25 = vector.multi_reduction <maximumf>, %24, %cst_18 [1] : vector<16x16xf32> to vector<16xf32>
    %26 = vector.shape_cast %25 : vector<16xf32> to vector<16x1xf32>
    %27 = vector.broadcast %26 : vector<16x1xf32> to vector<16x16xf32>
    %28 = arith.subf %24, %27 : vector<16x16xf32>
    %29 = math.exp %28 : vector<16x16xf32>
    %cst_19 = arith.constant dense<0.000000e+00> : vector<16xf32>
    %30 = vector.multi_reduction <add>, %29, %cst_19 [1] : vector<16x16xf32> to vector<16xf32>
    %31 = vector.shape_cast %30 : vector<16xf32> to vector<16x1xf32>
    %32 = tpu.reciprocal %31 {approx = true} : vector<16x1xf32> -> vector<16x1xf32>
    %33 = vector.broadcast %32 : vector<16x1xf32> to vector<16x16xf32>
    %34 = arith.mulf %29, %33 : vector<16x16xf32>
    %c0_20 = arith.constant 0 : index
    %c0_21 = arith.constant 0 : index
    %35 = vector.load %arg8[%c0_20, %c0_21] : memref<16x16xf32, #tpu.memory_space<vmem>>, vector<16x16xf32>
    tpu.vector_store %arg8[%c0_20, %c0_21], %34 {strides = array<i32>} : memref<16x16xf32, #tpu.memory_space<vmem>>, vector<16x16xf32>,
    return
  }
  func.func @transform_0(%arg0: i32) -> (i32, i32) {
    %c0_i32 = arith.constant 0 : i32
    %c0_i32_0 = arith.constant 0 : i32
    return %arg0, %c0_i32 : i32, i32
  }
  func.func @transform_1(%arg0: i32) -> (i32, i32) {
    %c0_i32 = arith.constant 0 : i32
    %c0_i32_0 = arith.constant 0 : i32
    %c0_i32_1 = arith.constant 0 : i32
    return %c0_i32, %c0_i32_0 : i32, i32
  }
  func.func @transform_2(%arg0: i32) -> (i32, i32) {
    %c0_i32 = arith.constant 0 : i32
    %c0_i32_0 = arith.constant 0 : i32
    %c0_i32_1 = arith.constant 0 : i32
    return %c0_i32, %c0_i32_0 : i32, i32
  }
  func.func @transform_3(%arg0: i32) -> (i32, i32) {
    %c0_i32 = arith.constant 0 : i32
    %c0_i32_0 = arith.constant 0 : i32
    %c0_i32_1 = arith.constant 0 : i32
    return %c0_i32, %c0_i32_0 : i32, i32
  }
  func.func @transform_4(%arg0: i32) -> (i32, i32) {
    %c0_i32 = arith.constant 0 : i32
    %c0_i32_0 = arith.constant 0 : i32
    %c0_i32_1 = arith.constant 0 : i32
    return %c0_i32, %c0_i32_0 : i32, i32
  }
  func.func @transform_5(%arg0: i32) -> (i32, i32) {
    %c0_i32 = arith.constant 0 : i32
    %c0_i32_0 = arith.constant 0 : i32
    %c0_i32_1 = arith.constant 0 : i32
    return %c0_i32, %c0_i32_0 : i32, i32
  }
  func.func @transform_6(%arg0: i32) -> (i32, i32) {
    %c0_i32 = arith.constant 0 : i32
    %c0_i32_0 = arith.constant 0 : i32
    %c0_i32_1 = arith.constant 0 : i32
    return %c0_i32, %c0_i32_0 : i32, i32
  }
  func.func @transform_7(%arg0: i32) -> (i32, i32) {
    %c0_i32 = arith.constant 0 : i32
    %c0_i32_0 = arith.constant 0 : i32
    return %arg0, %c0_i32 : i32, i32
  }
}

</mosaic_0001>

<llo_original>
// kernel: tpu_custom_call.1
$region0: #{tpu_custom_call.1}
  #allocation0 [shape = 'u32[]', space=smem, size = 0x4, offset = 0x4, fixed_abs, tag = 'smem constant byte address 0x4 - core index']
  #allocation1 [shape = 'u32[144,128]{1,0:T(1,128)}', space=vmem, size = 0x12000, scoped, tag = 'internal scratch']
  %s0 = inlined_call_operand.vmem [shape: f32[16,1024], index: 0, kind: input, shape index: {}]
  %s1 = inlined_call_operand.hbm [shape: bf16[1024,256], index: 1, kind: input, shape index: {}]
  %s2 = inlined_call_operand.vmem [shape: f32[1,256], index: 2, kind: input, shape index: {}]
  %s3 = inlined_call_operand.vmem [shape: bf16[256,64], index: 3, kind: input, shape index: {}]
  %s4 = inlined_call_operand.vmem [shape: f32[1,64], index: 4, kind: input, shape index: {}]
  %s5 = inlined_call_operand.vmem [shape: bf16[64,16], index: 5, kind: input, shape index: {}]
  %s6 = inlined_call_operand.vmem [shape: f32[1,16], index: 6, kind: input, shape index: {}]
  %s7 = inlined_call_operand.hbm [shape: f32[16,16], index: 7, kind: output, shape index: {}]
  %s8 = sld [smem:[#allocation0]]
  $region42: #{tpu_custom_call.1} parent=0
    _
  %s10 = ssub.s32 1, %s8
  %s11 = scalar_select 0, %s10, %s8
  $region1: #{tpu_custom_call.1} parent=0
    #allocation2 [shape = 'u8[524288]{0}', space=vmem, size = 0x80000, scoped, tag = 'input window, operand 1, single buffered']
    #allocation3 [shape = 's32[1]{0}', space=sflag, size = 0x4, scoped, tag = 'scoped memory for tpu_custom_call.1']
    #allocation4 [shape = 's32[1]{0}', space=sflag, size = 0x4, scoped, tag = 'scoped memory for tpu_custom_call.1']
    #allocation5 [shape = 'u8[8192]{0}', space=vmem, size = 0x2000, scoped, tag = 'output window, operand 0, single buffered']
    %12 = vsyncpa [#allocation3], 0
    %13 = vsyncpa [#allocation4], 0
    // Predicated region
    $region2: #{tpu_custom_call.1} parent=1 // pred_check
      _
    $region3: #{tpu_custom_call.1} parent=1 // pred_check_branch
      %15 = sbr.rel (0) target = $region5
    $region4: #{tpu_custom_call.1} parent=1 // pred_region
      _
    $region5: #{tpu_custom_call.1} parent=1 // pred_fallthru
      _
    // Predicated region
    $region6: #{tpu_custom_call.1} parent=1 // pred_check
      _
    $region7: #{tpu_custom_call.1} parent=1 // pred_check_branch
      %17 = sbr.rel (0) target = $region9
    $region8: #{tpu_custom_call.1} parent=1 // pred_region
      %s19 = ssub.s32 16384, 16384
      %20 = vsyncadd [#allocation3], %s19
      %s21 = sshll.u32 [#allocation2], 4
      %s22 = int_to_ptr.vmem [resolvable:$true] %s21
      %27 = dma.hbm_to_vmem [thread:$0]  %s1, 16384, %s22, [#allocation3], 128, 128, 8
    $region9: #{tpu_custom_call.1} parent=1 // pred_fallthru
      _
    // Predicated region
    $region10: #{tpu_custom_call.1} parent=1 // pred_check
      _
    $region11: #{tpu_custom_call.1} parent=1 // pred_check_branch
      %29 = sbr.rel (0) target = $region13
    $region12: #{tpu_custom_call.1} parent=1 // pred_region
      _
    $region13: #{tpu_custom_call.1} parent=1 // pred_fallthru
      _
    // Predicated region
    $region14: #{tpu_custom_call.1} parent=1 // pred_check
      _
    $region15: #{tpu_custom_call.1} parent=1 // pred_check_branch
      %31 = sbr.rel (0) target = $region17
    $region16: #{tpu_custom_call.1} parent=1 // pred_region
      _
    $region17: #{tpu_custom_call.1} parent=1 // pred_fallthru
      _
    // Predicated region
    $region18: #{tpu_custom_call.1} parent=1 // pred_check
      _
    $region19: #{tpu_custom_call.1} parent=1 // pred_check_branch
      %33 = sbr.rel (0) target = $region21
    $region20: #{tpu_custom_call.1} parent=1 // pred_region
      _
    $region21: #{tpu_custom_call.1} parent=1 // pred_fallthru
      _
    // Predicated region
    $region22: #{tpu_custom_call.1} parent=1 // pred_check
      _
    $region23: #{tpu_custom_call.1} parent=1 // pred_check_branch
      %35 = sbr.rel (0) target = $region25
    $region24: #{tpu_custom_call.1} parent=1 // pred_region
      _
    $region25: #{tpu_custom_call.1} parent=1 // pred_fallthru
      _
    // Predicated region
    $region26: #{tpu_custom_call.1} parent=1 // pred_check
      _
    $region27: #{tpu_custom_call.1} parent=1 // pred_check_branch
      %37 = sbr.rel (0) target = $region29
    $region28: #{tpu_custom_call.1} parent=1 // pred_region
      _
    $region29: #{tpu_custom_call.1} parent=1 // pred_fallthru
      _
    // Predicated region
    $region30: #{tpu_custom_call.1} parent=1 // pred_check
      _
    $region31: #{tpu_custom_call.1} parent=1 // pred_check_branch
      %39 = sbr.rel (0) target = $region33
    $region32: #{tpu_custom_call.1} parent=1 // pred_region
      %40 = dma.done [#allocation3], 16384
    $region33: #{tpu_custom_call.1} parent=1 // pred_fallthru
      _
    %v42 = vld [vmem:[%s0] sm:$0xff]
    %v43 = vld [vmem:[%s0 + $0x8] sm:$0xff]
    %v44 = vld [vmem:[%s0 + $0x10] sm:$0xff]
    %v45 = vld [vmem:[%s0 + $0x18] sm:$0xff]
    %v46 = vld [vmem:[%s0 + $0x20] sm:$0xff]
    %v47 = vld [vmem:[%s0 + $0x28] sm:$0xff]
    %v48 = vld [vmem:[%s0 + $0x30] sm:$0xff]
    %v49 = vld [vmem:[%s0 + $0x38] sm:$0xff]
    %v50 = vld [vmem:[%s0 + $0x40] sm:$0xff]
    %v51 = vld [vmem:[%s0 + $0x48] sm:$0xff]
    %v52 = vld [vmem:[%s0 + $0x50] sm:$0xff]
    %v53 = vld [vmem:[%s0 + $0x58] sm:$0xff]
    %v54 = vld [vmem:[%s0 + $0x60] sm:$0xff]
    %v55 = vld [vmem:[%s0 + $0x68] sm:$0xff]
    %v56 = vld [vmem:[%s0 + $0x70] sm:$0xff]
    %v57 = vld [vmem:[%s0 + $0x78] sm:$0xff]
    %v58 = vpack.c.bf16 %v50, %v42
    %v59 = vpack.c.bf16 %v51, %v43
    %v60 = vpack.c.bf16 %v52, %v44
    %v61 = vpack.c.bf16 %v53, %v45
    %v62 = vpack.c.bf16 %v54, %v46
    %v63 = vpack.c.bf16 %v55, %v47
    %v64 = vpack.c.bf16 %v56, %v48
    %v65 = vpack.c.bf16 %v57, %v49
    %v66 = vld [vmem:[#allocation2] sm:$0xff]
    %v67 = vld [vmem:[#allocation2 + $0x8] sm:$0xff]
    %v68 = vld [vmem:[#allocation2 + $0x10] sm:$0xff]
    %v69 = vld [vmem:[#allocation2 + $0x18] sm:$0xff]
    %v70 = vld [vmem:[#allocation2 + $0x20] sm:$0xff]
    %v71 = vld [vmem:[#allocation2 + $0x28] sm:$0xff]
    %v72 = vld [vmem:[#allocation2 + $0x30] sm:$0xff]
    %v73 = vld [vmem:[#allocation2 + $0x38] sm:$0xff]
    %v74 = vld [vmem:[#allocation2 + $0x40] sm:$0xff]
    %v75 = vld [vmem:[#allocation2 + $0x48] sm:$0xff]
    %v76 = vld [vmem:[#allocation2 + $0x50] sm:$0xff]
    %v77 = vld [vmem:[#allocation2 + $0x58] sm:$0xff]
    %v78 = vld [vmem:[#allocation2 + $0x60] sm:$0xff]
    %v79 = vld [vmem:[#allocation2 + $0x68] sm:$0xff]
    %v80 = vld [vmem:[#allocation2 + $0x70] sm:$0xff]
    %v81 = vld [vmem:[#allocation2 + $0x78] sm:$0xff]
    %v82 = vld [vmem:[#allocation2 + $0x80] sm:$0xff]
    %v83 = vld [vmem:[#allocation2 + $0x88] sm:$0xff]
    %v84 = vld [vmem:[#allocation2 + $0x90] sm:$0xff]
    %v85 = vld [vmem:[#allocation2 + $0x98] sm:$0xff]
    %v86 = vld [vmem:[#allocation2 + $0xa0] sm:$0xff]
    %v87 = vld [vmem:[#allocation2 + $0xa8] sm:$0xff]
    %v88 = vld [vmem:[#allocation2 + $0xb0] sm:$0xff]
    %v89 = vld [vmem:[#allocation2 + $0xb8] sm:$0xff]
    %v90 = vld [vmem:[#allocation2 + $0xc0] sm:$0xff]
    %v91 = vld [vmem:[#allocation2 + $0xc8] sm:$0xff]
    %v92 = vld [vmem:[#allocation2 + $0xd0] sm:$0xff]
    %v93 = vld [vmem:[#allocation2 + $0xd8] sm:$0xff]
    %v94 = vld [vmem:[#allocation2 + $0xe0] sm:$0xff]
    %v95 = vld [vmem:[#allocation2 + $0xe8] sm:$0xff]
    %v96 = vld [vmem:[#allocation2 + $0xf0] sm:$0xff]
    %v97 = vld [vmem:[#allocation2 + $0xf8] sm:$0xff]
    %v98 = vld [vmem:[#allocation2 + $0x100] sm:$0xff]
    %v99 = vld [vmem:[#allocation2 + $0x108] sm:$0xff]
    %v100 = vld [vmem:[#allocation2 + $0x110] sm:$0xff]
    %v101 = vld [vmem:[#allocation2 + $0x118] sm:$0xff]
    %v102 = vld [vmem:[#allocation2 + $0x120] sm:$0xff]
    %v103 = vld [vmem:[#allocation2 + $0x128] sm:$0xff]
    %v104 = vld [vmem:[#allocation2 + $0x130] sm:$0xff]
    %v105 = vld [vmem:[#allocation2 + $0x138] sm:$0xff]
    %v106 = vld [vmem:[#allocation2 + $0x140] sm:$0xff]
    %v107 = vld [vmem:[#allocation2 + $0x148] sm:$0xff]
    %v108 = vld [vmem:[#allocation2 + $0x150] sm:$0xff]
    %v109 = vld [vmem:[#allocation2 + $0x158] sm:$0xff]
    %v110 = vld [vmem:[#allocation2 + $0x160] sm:$0xff]
    %v111 = vld [vmem:[#allocation2 + $0x168] sm:$0xff]
    %v112 = vld [vmem:[#allocation2 + $0x170] sm:$0xff]
    %v113 = vld [vmem:[#allocation2 + $0x178] sm:$0xff]
    %v114 = vld [vmem:[#allocation2 + $0x180] sm:$0xff]
    %v115 = vld [vmem:[#allocation2 + $0x188] sm:$0xff]
    %v116 = vld [vmem:[#allocation2 + $0x190] sm:$0xff]
    %v117 = vld [vmem:[#allocation2 + $0x198] sm:$0xff]
    %v118 = vld [vmem:[#allocation2 + $0x1a0] sm:$0xff]
    %v119 = vld [vmem:[#allocation2 + $0x1a8] sm:$0xff]
    %v120 = vld [vmem:[#allocation2 + $0x1b0] sm:$0xff]
    %v121 = vld [vmem:[#allocation2 + $0x1b8] sm:$0xff]
    %v122 = vld [vmem:[#allocation2 + $0x1c0] sm:$0xff]
    %v123 = vld [vmem:[#allocation2 + $0x1c8] sm:$0xff]
    %v124 = vld [vmem:[#allocation2 + $0x1d0] sm:$0xff]
    %v125 = vld [vmem:[#allocation2 + $0x1d8] sm:$0xff]
    %v126 = vld [vmem:[#allocation2 + $0x1e0] sm:$0xff]
    %v127 = vld [vmem:[#allocation2 + $0x1e8] sm:$0xff]
    %v128 = vld [vmem:[#allocation2 + $0x1f0] sm:$0xff]
    %v129 = vld [vmem:[#allocation2 + $0x1f8] sm:$0xff]
    %v130 = vld [vmem:[#allocation2 + $0x200] sm:$0xff]
    %v131 = vld [vmem:[#allocation2 + $0x208] sm:$0xff]
    %v132 = vld [vmem:[#allocation2 + $0x210] sm:$0xff]
    %v133 = vld [vmem:[#allocation2 + $0x218] sm:$0xff]
    %v134 = vld [vmem:[#allocation2 + $0x220] sm:$0xff]
    %v135 = vld [vmem:[#allocation2 + $0x228] sm:$0xff]
    %v136 = vld [vmem:[#allocation2 + $0x230] sm:$0xff]
    %v137 = vld [vmem:[#allocation2 + $0x238] sm:$0xff]
    %v138 = vld [vmem:[#allocation2 + $0x240] sm:$0xff]
    %v139 = vld [vmem:[#allocation2 + $0x248] sm:$0xff]
    %v140 = vld [vmem:[#allocation2 + $0x250] sm:$0xff]
    %v141 = vld [vmem:[#allocation2 + $0x258] sm:$0xff]
    %v142 = vld [vmem:[#allocation2 + $0x260] sm:$0xff]
    %v143 = vld [vmem:[#allocation2 + $0x268] sm:$0xff]
    %v144 = vld [vmem:[#allocation2 + $0x270] sm:$0xff]
    %v145 = vld [vmem:[#allocation2 + $0x278] sm:$0xff]
    %v146 = vld [vmem:[#allocation2 + $0x280] sm:$0xff]
    %v147 = vld [vmem:[#allocation2 + $0x288] sm:$0xff]
    %v148 = vld [vmem:[#allocation2 + $0x290] sm:$0xff]
    %v149 = vld [vmem:[#allocation2 + $0x298] sm:$0xff]
    %v150 = vld [vmem:[#allocation2 + $0x2a0] sm:$0xff]
    %v151 = vld [vmem:[#allocation2 + $0x2a8] sm:$0xff]
    %v152 = vld [vmem:[#allocation2 + $0x2b0] sm:$0xff]
    %v153 = vld [vmem:[#allocation2 + $0x2b8] sm:$0xff]
    %v154 = vld [vmem:[#allocation2 + $0x2c0] sm:$0xff]
    %v155 = vld [vmem:[#allocation2 + $0x2c8] sm:$0xff]
    %v156 = vld [vmem:[#allocation2 + $0x2d0] sm:$0xff]
    %v157 = vld [vmem:[#allocation2 + $0x2d8] sm:$0xff]
    %v158 = vld [vmem:[#allocation2 + $0x2e0] sm:$0xff]
    %v159 = vld [vmem:[#allocation2 + $0x2e8] sm:$0xff]
    %v160 = vld [vmem:[#allocation2 + $0x2f0] sm:$0xff]
    %v161 = vld [vmem:[#allocation2 + $0x2f8] sm:$0xff]
    %v162 = vld [vmem:[#allocation2 + $0x300] sm:$0xff]
    %v163 = vld [vmem:[#allocation2 + $0x308] sm:$0xff]
    %v164 = vld [vmem:[#allocation2 + $0x310] sm:$0xff]
    %v165 = vld [vmem:[#allocation2 + $0x318] sm:$0xff]
    %v166 = vld [vmem:[#allocation2 + $0x320] sm:$0xff]
    %v167 = vld [vmem:[#allocation2 + $0x328] sm:$0xff]
    %v168 = vld [vmem:[#allocation2 + $0x330] sm:$0xff]
    %v169 = vld [vmem:[#allocation2 + $0x338] sm:$0xff]
    %v170 = vld [vmem:[#allocation2 + $0x340] sm:$0xff]
    %v171 = vld [vmem:[#allocation2 + $0x348] sm:$0xff]
    %v172 = vld [vmem:[#allocation2 + $0x350] sm:$0xff]
    %v173 = vld [vmem:[#allocation2 + $0x358] sm:$0xff]
    %v174 = vld [vmem:[#allocation2 + $0x360] sm:$0xff]
    %v175 = vld [vmem:[#allocation2 + $0x368] sm:$0xff]
    %v176 = vld [vmem:[#allocation2 + $0x370] sm:$0xff]
    %v177 = vld [vmem:[#allocation2 + $0x378] sm:$0xff]
    %v178 = vld [vmem:[#allocation2 + $0x380] sm:$0xff]
    %v179 = vld [vmem:[#allocation2 + $0x388] sm:$0xff]
    %v180 = vld [vmem:[#allocation2 + $0x390] sm:$0xff]
    %v181 = vld [vmem:[#allocation2 + $0x398] sm:$0xff]
    %v182 = vld [vmem:[#allocation2 + $0x3a0] sm:$0xff]
    %v183 = vld [vmem:[#allocation2 + $0x3a8] sm:$0xff]
    %v184 = vld [vmem:[#allocation2 + $0x3b0] sm:$0xff]
    %v185 = vld [vmem:[#allocation2 + $0x3b8] sm:$0xff]
    %v186 = vld [vmem:[#allocation2 + $0x3c0] sm:$0xff]
    %v187 = vld [vmem:[#allocation2 + $0x3c8] sm:$0xff]
    %v188 = vld [vmem:[#allocation2 + $0x3d0] sm:$0xff]
    %v189 = vld [vmem:[#allocation2 + $0x3d8] sm:$0xff]
    %v190 = vld [vmem:[#allocation2 + $0x3e0] sm:$0xff]
    %v191 = vld [vmem:[#allocation2 + $0x3e8] sm:$0xff]
    %v192 = vld [vmem:[#allocation2 + $0x3f0] sm:$0xff]
    %v193 = vld [vmem:[#allocation2 + $0x3f8] sm:$0xff]
    %v194 = vld [vmem:[%s2] sm:$0x3]
    %v196 = vlaneseq
    %v197 = vshrl.u32 %v196, 7
    %v198 = vsub.s32 0, %v197
    %v199 = vrot.slane %v194, %v198
    %v200 = vlaneseq
    %v201 = vshrl.u32 %v200, 7
    %v202 = vsub.s32 1, %v201
    %v203 = vrot.slane %v194, %v202
    %v334 = vunpack.c.l.b16 %v66
    %v335 = vunpack.c.h.b16 %v66
    %v336 = vunpack.c.l.b16 %v67
    %v337 = vunpack.c.h.b16 %v67
    %v338 = vunpack.c.l.b16 %v68
    %v339 = vunpack.c.h.b16 %v68
    %v340 = vunpack.c.l.b16 %v69
    %v341 = vunpack.c.h.b16 %v69
    %v342 = vunpack.c.l.b16 %v70
    %v343 = vunpack.c.h.b16 %v70
    %v344 = vunpack.c.l.b16 %v71
    %v345 = vunpack.c.h.b16 %v71
    %v346 = vunpack.c.l.b16 %v72
    %v347 = vunpack.c.h.b16 %v72
    %v348 = vunpack.c.l.b16 %v73
    %v349 = vunpack.c.h.b16 %v73
    %v350 = vunpack.c.l.b16 %v74
    %v351 = vunpack.c.h.b16 %v74
    %v352 = vunpack.c.l.b16 %v75
    %v353 = vunpack.c.h.b16 %v75
    %v354 = vunpack.c.l.b16 %v76
    %v355 = vunpack.c.h.b16 %v76
    %v356 = vunpack.c.l.b16 %v77
    %v357 = vunpack.c.h.b16 %v77
    %v358 = vunpack.c.l.b16 %v78
    %v359 = vunpack.c.h.b16 %v78
    %v360 = vunpack.c.l.b16 %v79
    %v361 = vunpack.c.h.b16 %v79
    %v362 = vunpack.c.l.b16 %v80
    %v363 = vunpack.c.h.b16 %v80
    %v364 = vunpack.c.l.b16 %v81
    %v365 = vunpack.c.h.b16 %v81
    %v366 = vunpack.c.l.b16 %v82
    %v367 = vunpack.c.h.b16 %v82
    %v368 = vunpack.c.l.b16 %v83
    %v369 = vunpack.c.h.b16 %v83
    %v370 = vunpack.c.l.b16 %v84
    %v371 = vunpack.c.h.b16 %v84
    %v372 = vunpack.c.l.b16 %v85
    %v373 = vunpack.c.h.b16 %v85
    %v374 = vunpack.c.l.b16 %v86
    %v375 = vunpack.c.h.b16 %v86
    %v376 = vunpack.c.l.b16 %v87
    %v377 = vunpack.c.h.b16 %v87
    %v378 = vunpack.c.l.b16 %v88
    %v379 = vunpack.c.h.b16 %v88
    %v380 = vunpack.c.l.b16 %v89
    %v381 = vunpack.c.h.b16 %v89
    %v382 = vunpack.c.l.b16 %v90
    %v383 = vunpack.c.h.b16 %v90
    %v384 = vunpack.c.l.b16 %v91
    %v385 = vunpack.c.h.b16 %v91
    %v386 = vunpack.c.l.b16 %v92
    %v387 = vunpack.c.h.b16 %v92
    %v388 = vunpack.c.l.b16 %v93
    %v389 = vunpack.c.h.b16 %v93
    %v390 = vunpack.c.l.b16 %v94
    %v391 = vunpack.c.h.b16 %v94
    %v392 = vunpack.c.l.b16 %v95
    %v393 = vunpack.c.h.b16 %v95
    %v394 = vunpack.c.l.b16 %v96
    %v395 = vunpack.c.h.b16 %v96
    %v396 = vunpack.c.l.b16 %v97
    %v397 = vunpack.c.h.b16 %v97
    %v398 = vunpack.c.l.b16 %v98
    %v399 = vunpack.c.h.b16 %v98
    %v400 = vunpack.c.l.b16 %v99
    %v401 = vunpack.c.h.b16 %v99
    %v402 = vunpack.c.l.b16 %v100
    %v403 = vunpack.c.h.b16 %v100
    %v404 = vunpack.c.l.b16 %v101
    %v405 = vunpack.c.h.b16 %v101
    %v406 = vunpack.c.l.b16 %v102
    %v407 = vunpack.c.h.b16 %v102
    %v408 = vunpack.c.l.b16 %v103
    %v409 = vunpack.c.h.b16 %v103
    %v410 = vunpack.c.l.b16 %v104
    %v411 = vunpack.c.h.b16 %v104
    %v412 = vunpack.c.l.b16 %v105
    %v413 = vunpack.c.h.b16 %v105
    %v414 = vunpack.c.l.b16 %v106
    %v415 = vunpack.c.h.b16 %v106
    %v416 = vunpack.c.l.b16 %v107
    %v417 = vunpack.c.h.b16 %v107
    %v418 = vunpack.c.l.b16 %v108
    %v419 = vunpack.c.h.b16 %v108
    %v420 = vunpack.c.l.b16 %v109
    %v421 = vunpack.c.h.b16 %v109
    %v422 = vunpack.c.l.b16 %v110
    %v423 = vunpack.c.h.b16 %v110
    %v424 = vunpack.c.l.b16 %v111
    %v425 = vunpack.c.h.b16 %v111
    %v426 = vunpack.c.l.b16 %v112
    %v427 = vunpack.c.h.b16 %v112
    %v428 = vunpack.c.l.b16 %v113
    %v429 = vunpack.c.h.b16 %v113
    %v430 = vunpack.c.l.b16 %v114
    %v431 = vunpack.c.h.b16 %v114
    %v432 = vunpack.c.l.b16 %v115
    %v433 = vunpack.c.h.b16 %v115
    %v434 = vunpack.c.l.b16 %v116
    %v435 = vunpack.c.h.b16 %v116
    %v436 = vunpack.c.l.b16 %v117
    %v437 = vunpack.c.h.b16 %v117
    %v438 = vunpack.c.l.b16 %v118
    %v439 = vunpack.c.h.b16 %v118
    %v440 = vunpack.c.l.b16 %v119
    %v441 = vunpack.c.h.b16 %v119
    %v442 = vunpack.c.l.b16 %v120
    %v443 = vunpack.c.h.b16 %v120
    %v444 = vunpack.c.l.b16 %v121
    %v445 = vunpack.c.h.b16 %v121
    %v446 = vunpack.c.l.b16 %v122
    %v447 = vunpack.c.h.b16 %v122
    %v448 = vunpack.c.l.b16 %v123
    %v449 = vunpack.c.h.b16 %v123
    %v450 = vunpack.c.l.b16 %v124
    %v451 = vunpack.c.h.b16 %v124
    %v452 = vunpack.c.l.b16 %v125
    %v453 = vunpack.c.h.b16 %v125
    %v454 = vunpack.c.l.b16 %v126
    %v455 = vunpack.c.h.b16 %v126
    %v456 = vunpack.c.l.b16 %v127
    %v457 = vunpack.c.h.b16 %v127
    %v458 = vunpack.c.l.b16 %v128
    %v459 = vunpack.c.h.b16 %v128
    %v460 = vunpack.c.l.b16 %v129
    %v461 = vunpack.c.h.b16 %v129
    %v462 = vunpack.c.l.b16 %v130
    %v463 = vunpack.c.h.b16 %v130
    %v464 = vunpack.c.l.b16 %v131
    %v465 = vunpack.c.h.b16 %v131
    %v466 = vunpack.c.l.b16 %v132
    %v467 = vunpack.c.h.b16 %v132
    %v468 = vunpack.c.l.b16 %v133
    %v469 = vunpack.c.h.b16 %v133
    %v470 = vunpack.c.l.b16 %v134
    %v471 = vunpack.c.h.b16 %v134
    %v472 = vunpack.c.l.b16 %v135
    %v473 = vunpack.c.h.b16 %v135
    %v474 = vunpack.c.l.b16 %v136
    %v475 = vunpack.c.h.b16 %v136
    %v476 = vunpack.c.l.b16 %v137
    %v477 = vunpack.c.h.b16 %v137
    %v478 = vunpack.c.l.b16 %v138
    %v479 = vunpack.c.h.b16 %v138
    %v480 = vunpack.c.l.b16 %v139
    %v481 = vunpack.c.h.b16 %v139
    %v482 = vunpack.c.l.b16 %v140
    %v483 = vunpack.c.h.b16 %v140
    %v484 = vunpack.c.l.b16 %v141
    %v485 = vunpack.c.h.b16 %v141
    %v486 = vunpack.c.l.b16 %v142
    %v487 = vunpack.c.h.b16 %v142
    %v488 = vunpack.c.l.b16 %v143
    %v489 = vunpack.c.h.b16 %v143
    %v490 = vunpack.c.l.b16 %v144
    %v491 = vunpack.c.h.b16 %v144
    %v492 = vunpack.c.l.b16 %v145
    %v493 = vunpack.c.h.b16 %v145
    %v494 = vunpack.c.l.b16 %v146
    %v495 = vunpack.c.h.b16 %v146
    %v496 = vunpack.c.l.b16 %v147
    %v497 = vunpack.c.h.b16 %v147
    %v498 = vunpack.c.l.b16 %v148
    %v499 = vunpack.c.h.b16 %v148
    %v500 = vunpack.c.l.b16 %v149
    %v501 = vunpack.c.h.b16 %v149
    %v502 = vunpack.c.l.b16 %v150
    %v503 = vunpack.c.h.b16 %v150
    %v504 = vunpack.c.l.b16 %v151
    %v505 = vunpack.c.h.b16 %v151
    %v506 = vunpack.c.l.b16 %v152
    %v507 = vunpack.c.h.b16 %v152
    %v508 = vunpack.c.l.b16 %v153
    %v509 = vunpack.c.h.b16 %v153
    %v510 = vunpack.c.l.b16 %v154
    %v511 = vunpack.c.h.b16 %v154
    %v512 = vunpack.c.l.b16 %v155
    %v513 = vunpack.c.h.b16 %v155
    %v514 = vunpack.c.l.b16 %v156
    %v515 = vunpack.c.h.b16 %v156
    %v516 = vunpack.c.l.b16 %v157
    %v517 = vunpack.c.h.b16 %v157
    %v518 = vunpack.c.l.b16 %v158
    %v519 = vunpack.c.h.b16 %v158
    %v520 = vunpack.c.l.b16 %v159
    %v521 = vunpack.c.h.b16 %v159
    %v522 = vunpack.c.l.b16 %v160
    %v523 = vunpack.c.h.b16 %v160
    %v524 = vunpack.c.l.b16 %v161
    %v525 = vunpack.c.h.b16 %v161
    %v526 = vunpack.c.l.b16 %v162
    %v527 = vunpack.c.h.b16 %v162
    %v528 = vunpack.c.l.b16 %v163
    %v529 = vunpack.c.h.b16 %v163
    %v530 = vunpack.c.l.b16 %v164
    %v531 = vunpack.c.h.b16 %v164
    %v532 = vunpack.c.l.b16 %v165
    %v533 = vunpack.c.h.b16 %v165
    %v534 = vunpack.c.l.b16 %v166
    %v535 = vunpack.c.h.b16 %v166
    %v536 = vunpack.c.l.b16 %v167
    %v537 = vunpack.c.h.b16 %v167
    %v538 = vunpack.c.l.b16 %v168
    %v539 = vunpack.c.h.b16 %v168
    %v540 = vunpack.c.l.b16 %v169
    %v541 = vunpack.c.h.b16 %v169
    %v542 = vunpack.c.l.b16 %v170
    %v543 = vunpack.c.h.b16 %v170
    %v544 = vunpack.c.l.b16 %v171
    %v545 = vunpack.c.h.b16 %v171
    %v546 = vunpack.c.l.b16 %v172
    %v547 = vunpack.c.h.b16 %v172
    %v548 = vunpack.c.l.b16 %v173
    %v549 = vunpack.c.h.b16 %v173
    %v550 = vunpack.c.l.b16 %v174
    %v551 = vunpack.c.h.b16 %v174
    %v552 = vunpack.c.l.b16 %v175
    %v553 = vunpack.c.h.b16 %v175
    %v554 = vunpack.c.l.b16 %v176
    %v555 = vunpack.c.h.b16 %v176
    %v556 = vunpack.c.l.b16 %v177
    %v557 = vunpack.c.h.b16 %v177
    %v558 = vunpack.c.l.b16 %v178
    %v559 = vunpack.c.h.b16 %v178
    %v560 = vunpack.c.l.b16 %v179
    %v561 = vunpack.c.h.b16 %v179
    %v562 = vunpack.c.l.b16 %v180
    %v563 = vunpack.c.h.b16 %v180
    %v564 = vunpack.c.l.b16 %v181
    %v565 = vunpack.c.h.b16 %v181
    %v566 = vunpack.c.l.b16 %v182
    %v567 = vunpack.c.h.b16 %v182
    %v568 = vunpack.c.l.b16 %v183
    %v569 = vunpack.c.h.b16 %v183
    %v570 = vunpack.c.l.b16 %v184
    %v571 = vunpack.c.h.b16 %v184
    %v572 = vunpack.c.l.b16 %v185
    %v573 = vunpack.c.h.b16 %v185
    %v574 = vunpack.c.l.b16 %v186
    %v575 = vunpack.c.h.b16 %v186
    %v576 = vunpack.c.l.b16 %v187
    %v577 = vunpack.c.h.b16 %v187
    %v578 = vunpack.c.l.b16 %v188
    %v579 = vunpack.c.h.b16 %v188
    %v580 = vunpack.c.l.b16 %v189
    %v581 = vunpack.c.h.b16 %v189
    %v582 = vunpack.c.l.b16 %v190
    %v583 = vunpack.c.h.b16 %v190
    %v584 = vunpack.c.l.b16 %v191
    %v585 = vunpack.c.h.b16 %v191
    %v586 = vunpack.c.l.b16 %v192
    %v587 = vunpack.c.h.b16 %v192
    %v588 = vunpack.c.l.b16 %v193
    %v589 = vunpack.c.h.b16 %v193
    %v590 = vpack.c.b16 %v336, %v334
    %v591 = vpack.c.b16 %v337, %v335
    %v592 = vpack.c.b16 %v340, %v338
    %v593 = vpack.c.b16 %v341, %v339
    %v594 = vpack.c.b16 %v344, %v342
    %v595 = vpack.c.b16 %v345, %v343
    %v596 = vpack.c.b16 %v348, %v346
    %v597 = vpack.c.b16 %v349, %v347
    %v598 = vpack.c.b16 %v352, %v350
    %v599 = vpack.c.b16 %v353, %v351
    %v600 = vpack.c.b16 %v356, %v354
    %v601 = vpack.c.b16 %v357, %v355
    %v602 = vpack.c.b16 %v360, %v358
    %v603 = vpack.c.b16 %v361, %v359
    %v604 = vpack.c.b16 %v364, %v362
    %v605 = vpack.c.b16 %v365, %v363
    %v606 = vpack.c.b16 %v368, %v366
    %v607 = vpack.c.b16 %v369, %v367
    %v608 = vpack.c.b16 %v372, %v370
    %v609 = vpack.c.b16 %v373, %v371
    %v610 = vpack.c.b16 %v376, %v374
    %v611 = vpack.c.b16 %v377, %v375
    %v612 = vpack.c.b16 %v380, %v378
    %v613 = vpack.c.b16 %v381, %v379
    %v614 = vpack.c.b16 %v384, %v382
    %v615 = vpack.c.b16 %v385, %v383
    %v616 = vpack.c.b16 %v388, %v386
    %v617 = vpack.c.b16 %v389, %v387
    %v618 = vpack.c.b16 %v392, %v390
    %v619 = vpack.c.b16 %v393, %v391
    %v620 = vpack.c.b16 %v396, %v394
    %v621 = vpack.c.b16 %v397, %v395
    %v622 = vpack.c.b16 %v400, %v398
    %v623 = vpack.c.b16 %v401, %v399
    %v624 = vpack.c.b16 %v404, %v402
    %v625 = vpack.c.b16 %v405, %v403
    %v626 = vpack.c.b16 %v408, %v406
    %v627 = vpack.c.b16 %v409, %v407
    %v628 = vpack.c.b16 %v412, %v410
    %v629 = vpack.c.b16 %v413, %v411
    %v630 = vpack.c.b16 %v416, %v414
    %v631 = vpack.c.b16 %v417, %v415
    %v632 = vpack.c.b16 %v420, %v418
    %v633 = vpack.c.b16 %v421, %v419
    %v634 = vpack.c.b16 %v424, %v422
    %v635 = vpack.c.b16 %v425, %v423
    %v636 = vpack.c.b16 %v428, %v426
    %v637 = vpack.c.b16 %v429, %v427
    %v638 = vpack.c.b16 %v432, %v430
    %v639 = vpack.c.b16 %v433, %v431
    %v640 = vpack.c.b16 %v436, %v434
    %v641 = vpack.c.b16 %v437, %v435
    %v642 = vpack.c.b16 %v440, %v438
    %v643 = vpack.c.b16 %v441, %v439
    %v644 = vpack.c.b16 %v444, %v442
    %v645 = vpack.c.b16 %v445, %v443
    %v646 = vpack.c.b16 %v448, %v446
    %v647 = vpack.c.b16 %v449, %v447
    %v648 = vpack.c.b16 %v452, %v450
    %v649 = vpack.c.b16 %v453, %v451
    %v650 = vpack.c.b16 %v456, %v454
    %v651 = vpack.c.b16 %v457, %v455
    %v652 = vpack.c.b16 %v460, %v458
    %v653 = vpack.c.b16 %v461, %v459
    %v654 = vpack.c.b16 %v464, %v462
    %v655 = vpack.c.b16 %v465, %v463
    %v656 = vpack.c.b16 %v468, %v466
    %v657 = vpack.c.b16 %v469, %v467
    %v658 = vpack.c.b16 %v472, %v470
    %v659 = vpack.c.b16 %v473, %v471
    %v660 = vpack.c.b16 %v476, %v474
    %v661 = vpack.c.b16 %v477, %v475
    %v662 = vpack.c.b16 %v480, %v478
    %v663 = vpack.c.b16 %v481, %v479
    %v664 = vpack.c.b16 %v484, %v482
    %v665 = vpack.c.b16 %v485, %v483
    %v666 = vpack.c.b16 %v488, %v486
    %v667 = vpack.c.b16 %v489, %v487
    %v668 = vpack.c.b16 %v492, %v490
    %v669 = vpack.c.b16 %v493, %v491
    %v670 = vpack.c.b16 %v496, %v494
    %v671 = vpack.c.b16 %v497, %v495
    %v672 = vpack.c.b16 %v500, %v498
    %v673 = vpack.c.b16 %v501, %v499
    %v674 = vpack.c.b16 %v504, %v502
    %v675 = vpack.c.b16 %v505, %v503
    %v676 = vpack.c.b16 %v508, %v506
    %v677 = vpack.c.b16 %v509, %v507
    %v678 = vpack.c.b16 %v512, %v510
    %v679 = vpack.c.b16 %v513, %v511
    %v680 = vpack.c.b16 %v516, %v514
    %v681 = vpack.c.b16 %v517, %v515
    %v682 = vpack.c.b16 %v520, %v518
    %v683 = vpack.c.b16 %v521, %v519
    %v684 = vpack.c.b16 %v524, %v522
    %v685 = vpack.c.b16 %v525, %v523
    %v686 = vpack.c.b16 %v528, %v526
    %v687 = vpack.c.b16 %v529, %v527
    %v688 = vpack.c.b16 %v532, %v530
    %v689 = vpack.c.b16 %v533, %v531
    %v690 = vpack.c.b16 %v536, %v534
    %v691 = vpack.c.b16 %v537, %v535
    %v692 = vpack.c.b16 %v540, %v538
    %v693 = vpack.c.b16 %v541, %v539
    %v694 = vpack.c.b16 %v544, %v542
    %v695 = vpack.c.b16 %v545, %v543
    %v696 = vpack.c.b16 %v548, %v546
    %v697 = vpack.c.b16 %v549, %v547
    %v698 = vpack.c.b16 %v552, %v550
    %v699 = vpack.c.b16 %v553, %v551
    %v700 = vpack.c.b16 %v556, %v554
    %v701 = vpack.c.b16 %v557, %v555
    %v702 = vpack.c.b16 %v560, %v558
    %v703 = vpack.c.b16 %v561, %v559
    %v704 = vpack.c.b16 %v564, %v562
    %v705 = vpack.c.b16 %v565, %v563
    %v706 = vpack.c.b16 %v568, %v566
    %v707 = vpack.c.b16 %v569, %v567
    %v708 = vpack.c.b16 %v572, %v570
    %v709 = vpack.c.b16 %v573, %v571
    %v710 = vpack.c.b16 %v576, %v574
    %v711 = vpack.c.b16 %v577, %v575
    %v712 = vpack.c.b16 %v580, %v578
    %v713 = vpack.c.b16 %v581, %v579
    %v714 = vpack.c.b16 %v584, %v582
    %v715 = vpack.c.b16 %v585, %v583
    %v716 = vpack.c.b16 %v588, %v586
    %v717 = vpack.c.b16 %v589, %v587
    %846 = vmatprep.subr.bf16.mxu0 %v591
    %847 = vmatpush1.bf16.msra.mxu0 %v590
    %848 = vmatprep.subr.bf16.mxu0 %v593
    %849 = vmatpush1.bf16.msra.mxu0 %v592
    %850 = vmatprep.subr.bf16.mxu0 %v595
    %851 = vmatpush1.bf16.msra.mxu0 %v594
    %852 = vmatprep.subr.bf16.mxu0 %v597
    %853 = vmatpush1.bf16.msra.mxu0 %v596
    %854 = vmatprep.subr.bf16.mxu0 %v599
    %855 = vmatpush1.bf16.msra.mxu0 %v598
    %856 = vmatprep.subr.bf16.mxu0 %v601
    %857 = vmatpush1.bf16.msra.mxu0 %v600
    %858 = vmatprep.subr.bf16.mxu0 %v603
    %859 = vmatpush1.bf16.msra.mxu0 %v602
    %860 = vmatprep.subr.bf16.mxu0 %v605
    %861 = vmatpush1.bf16.msra.mxu0 %v604
    %862 = vmatprep.subr.bf16.mxu0 %v607
    %863 = vmatpush1.bf16.msra.mxu0 %v606
    %864 = vmatprep.subr.bf16.mxu0 %v609
    %865 = vmatpush1.bf16.msra.mxu0 %v608
    %866 = vmatprep.subr.bf16.mxu0 %v611
    %867 = vmatpush1.bf16.msra.mxu0 %v610
    %868 = vmatprep.subr.bf16.mxu0 %v613
    %869 = vmatpush1.bf16.msra.mxu0 %v612
    %870 = vmatprep.subr.bf16.mxu0 %v615
    %871 = vmatpush1.bf16.msra.mxu0 %v614
    %872 = vmatprep.subr.bf16.mxu0 %v617
    %873 = vmatpush1.bf16.msra.mxu0 %v616
    %874 = vmatprep.subr.bf16.mxu0 %v619
    %875 = vmatpush1.bf16.msra.mxu0 %v618
    %876 = vmatprep.subr.bf16.mxu0 %v621
    %877 = vmatpush1.bf16.msra.mxu0 %v620
    %878 = vmatprep.mubr.bf16.mxu0 %v59
    %879 = vmatmul.mubr.bf16.gmra.mrb[0].mxu0 %v58
    %v880 = vpop.f32.mrb[0].mxu0
    %v881 = vadd.f32 %v199, %v880
    %v882 = vpop.f32.mrb[0].mxu0
    %v883 = vadd.f32 %v203, %v882
    %v884 = vpop.f32.mrb[0].mxu0
    %v885 = vadd.f32 %v199, %v884
    %v886 = vpop.f32.mrb[0].mxu0
    %v887 = vadd.f32 %v203, %v886
    %888 = vdwg.mxu0
    %889 = vmatprep.subr.bf16.mxu0 %v623
    %890 = vmatpush1.bf16.msra.mxu0 %v622
    %891 = vmatprep.subr.bf16.mxu0 %v625
    %892 = vmatpush1.bf16.msra.mxu0 %v624
    %893 = vmatprep.subr.bf16.mxu0 %v627
    %894 = vmatpush1.bf16.msra.mxu0 %v626
    %895 = vmatprep.subr.bf16.mxu0 %v629
    %896 = vmatpush1.bf16.msra.mxu0 %v628
    %897 = vmatprep.subr.bf16.mxu0 %v631
    %898 = vmatpush1.bf16.msra.mxu0 %v630
    %899 = vmatprep.subr.bf16.mxu0 %v633
    %900 = vmatpush1.bf16.msra.mxu0 %v632
    %901 = vmatprep.subr.bf16.mxu0 %v635
    %902 = vmatpush1.bf16.msra.mxu0 %v634
    %903 = vmatprep.subr.bf16.mxu0 %v637
    %904 = vmatpush1.bf16.msra.mxu0 %v636
    %905 = vmatprep.subr.bf16.mxu0 %v639
    %906 = vmatpush1.bf16.msra.mxu0 %v638
    %907 = vmatprep.subr.bf16.mxu0 %v641
    %908 = vmatpush1.bf16.msra.mxu0 %v640
    %909 = vmatprep.subr.bf16.mxu0 %v643
    %910 = vmatpush1.bf16.msra.mxu0 %v642
    %911 = vmatprep.subr.bf16.mxu0 %v645
    %912 = vmatpush1.bf16.msra.mxu0 %v644
    %913 = vmatprep.subr.bf16.mxu0 %v647
    %914 = vmatpush1.bf16.msra.mxu0 %v646
    %915 = vmatprep.subr.bf16.mxu0 %v649
    %916 = vmatpush1.bf16.msra.mxu0 %v648
    %917 = vmatprep.subr.bf16.mxu0 %v651
    %918 = vmatpush1.bf16.msra.mxu0 %v650
    %919 = vmatprep.subr.bf16.mxu0 %v653
    %920 = vmatpush1.bf16.msra.mxu0 %v652
    %921 = vmatprep.mubr.bf16.mxu0 %v61
    %922 = vmatmul.mubr.bf16.gmra.mrb[0].mxu0 %v60
    %v923 = vpop.f32.mrb[0].mxu0
    %v924 = vadd.f32 %v881, %v923
    %v925 = vpop.f32.mrb[0].mxu0
    %v926 = vadd.f32 %v883, %v925
    %v927 = vpop.f32.mrb[0].mxu0
    %v928 = vadd.f32 %v885, %v927
    %v929 = vpop.f32.mrb[0].mxu0
    %v930 = vadd.f32 %v887, %v929
    %931 = vdwg.mxu0
    %932 = vmatprep.subr.bf16.mxu0 %v655
    %933 = vmatpush1.bf16.msra.mxu0 %v654
    %934 = vmatprep.subr.bf16.mxu0 %v657
    %935 = vmatpush1.bf16.msra.mxu0 %v656
    %936 = vmatprep.subr.bf16.mxu0 %v659
    %937 = vmatpush1.bf16.msra.mxu0 %v658
    %938 = vmatprep.subr.bf16.mxu0 %v661
    %939 = vmatpush1.bf16.msra.mxu0 %v660
    %940 = vmatprep.subr.bf16.mxu0 %v663
    %941 = vmatpush1.bf16.msra.mxu0 %v662
    %942 = vmatprep.subr.bf16.mxu0 %v665
    %943 = vmatpush1.bf16.msra.mxu0 %v664
    %944 = vmatprep.subr.bf16.mxu0 %v667
    %945 = vmatpush1.bf16.msra.mxu0 %v666
    %946 = vmatprep.subr.bf16.mxu0 %v669
    %947 = vmatpush1.bf16.msra.mxu0 %v668
    %948 = vmatprep.subr.bf16.mxu0 %v671
    %949 = vmatpush1.bf16.msra.mxu0 %v670
    %950 = vmatprep.subr.bf16.mxu0 %v673
    %951 = vmatpush1.bf16.msra.mxu0 %v672
    %952 = vmatprep.subr.bf16.mxu0 %v675
    %953 = vmatpush1.bf16.msra.mxu0 %v674
    %954 = vmatprep.subr.bf16.mxu0 %v677
    %955 = vmatpush1.bf16.msra.mxu0 %v676
    %956 = vmatprep.subr.bf16.mxu0 %v679
    %957 = vmatpush1.bf16.msra.mxu0 %v678
    %958 = vmatprep.subr.bf16.mxu0 %v681
    %959 = vmatpush1.bf16.msra.mxu0 %v680
    %960 = vmatprep.subr.bf16.mxu0 %v683
    %961 = vmatpush1.bf16.msra.mxu0 %v682
    %962 = vmatprep.subr.bf16.mxu0 %v685
    %963 = vmatpush1.bf16.msra.mxu0 %v684
    %964 = vmatprep.mubr.bf16.mxu0 %v63
    %965 = vmatmul.mubr.bf16.gmra.mrb[0].mxu0 %v62
    %v966 = vpop.f32.mrb[0].mxu0
    %v967 = vadd.f32 %v924, %v966
    %v968 = vpop.f32.mrb[0].mxu0
    %v969 = vadd.f32 %v926, %v968
    %v970 = vpop.f32.mrb[0].mxu0
    %v971 = vadd.f32 %v928, %v970
    %v972 = vpop.f32.mrb[0].mxu0
    %v973 = vadd.f32 %v930, %v972
    %974 = vdwg.mxu0
    %975 = vmatprep.subr.bf16.mxu0 %v687
    %976 = vmatpush1.bf16.msra.mxu0 %v686
    %977 = vmatprep.subr.bf16.mxu0 %v689
    %978 = vmatpush1.bf16.msra.mxu0 %v688
    %979 = vmatprep.subr.bf16.mxu0 %v691
    %980 = vmatpush1.bf16.msra.mxu0 %v690
    %981 = vmatprep.subr.bf16.mxu0 %v693
    %982 = vmatpush1.bf16.msra.mxu0 %v692
    %983 = vmatprep.subr.bf16.mxu0 %v695
    %984 = vmatpush1.bf16.msra.mxu0 %v694
    %985 = vmatprep.subr.bf16.mxu0 %v697
    %986 = vmatpush1.bf16.msra.mxu0 %v696
    %987 = vmatprep.subr.bf16.mxu0 %v699
    %988 = vmatpush1.bf16.msra.mxu0 %v698
    %989 = vmatprep.subr.bf16.mxu0 %v701
    %990 = vmatpush1.bf16.msra.mxu0 %v700
    %991 = vmatprep.subr.bf16.mxu0 %v703
    %992 = vmatpush1.bf16.msra.mxu0 %v702
    %993 = vmatprep.subr.bf16.mxu0 %v705
    %994 = vmatpush1.bf16.msra.mxu0 %v704
    %995 = vmatprep.subr.bf16.mxu0 %v707
    %996 = vmatpush1.bf16.msra.mxu0 %v706
    %997 = vmatprep.subr.bf16.mxu0 %v709
    %998 = vmatpush1.bf16.msra.mxu0 %v708
    %999 = vmatprep.subr.bf16.mxu0 %v711
    %1000 = vmatpush1.bf16.msra.mxu0 %v710
    %1001 = vmatprep.subr.bf16.mxu0 %v713
    %1002 = vmatpush1.bf16.msra.mxu0 %v712
    %1003 = vmatprep.subr.bf16.mxu0 %v715
    %1004 = vmatpush1.bf16.msra.mxu0 %v714
    %1005 = vmatprep.subr.bf16.mxu0 %v717
    %1006 = vmatpush1.bf16.msra.mxu0 %v716
    %1007 = vmatprep.mubr.bf16.mxu0 %v65
    %1008 = vmatmul.mubr.bf16.gmra.mrb[0].mxu0 %v64
    %v1009 = vpop.f32.mrb[0].mxu0
    %v1010 = vadd.f32 %v967, %v1009
    %v1011 = vpop.f32.mrb[0].mxu0
    %v1012 = vadd.f32 %v969, %v1011
    %v1013 = vpop.f32.mrb[0].mxu0
    %v1014 = vadd.f32 %v971, %v1013
    %v1015 = vpop.f32.mrb[0].mxu0
    %v1016 = vadd.f32 %v973, %v1015
    %1017 = vdwg.mxu0
    %v1018 = vmax.f32 %v1010, 0.0
    %v1019 = vmax.f32 %v1012, 0.0
    %v1020 = vmax.f32 %v1014, 0.0
    %v1021 = vmax.f32 %v1016, 0.0
    %v1022 = vpack.c.bf16 %v1020, %v1018
    %v1023 = vpack.c.bf16 %v1021, %v1019
    %v1024 = vld [vmem:[%s3] sm:$0xf]
    %v1025 = vld [vmem:[%s3 + $0x4] sm:$0xf]
    %v1026 = vld [vmem:[%s3 + $0x8] sm:$0xf]
    %v1027 = vld [vmem:[%s3 + $0xc] sm:$0xf]
    %v1028 = vld [vmem:[%s3 + $0x10] sm:$0xf]
    %v1029 = vld [vmem:[%s3 + $0x14] sm:$0xf]
    %v1030 = vld [vmem:[%s3 + $0x18] sm:$0xf]
    %v1031 = vld [vmem:[%s3 + $0x1c] sm:$0xf]
    %v1032 = vld [vmem:[%s3 + $0x20] sm:$0xf]
    %v1033 = vld [vmem:[%s3 + $0x24] sm:$0xf]
    %v1034 = vld [vmem:[%s3 + $0x28] sm:$0xf]
    %v1035 = vld [vmem:[%s3 + $0x2c] sm:$0xf]
    %v1036 = vld [vmem:[%s3 + $0x30] sm:$0xf]
    %v1037 = vld [vmem:[%s3 + $0x34] sm:$0xf]
    %v1038 = vld [vmem:[%s3 + $0x38] sm:$0xf]
    %v1039 = vld [vmem:[%s3 + $0x3c] sm:$0xf]
    %v1040 = vld [vmem:[%s3 + $0x40] sm:$0xf]
    %v1041 = vld [vmem:[%s3 + $0x44] sm:$0xf]
    %v1042 = vld [vmem:[%s3 + $0x48] sm:$0xf]
    %v1043 = vld [vmem:[%s3 + $0x4c] sm:$0xf]
    %v1044 = vld [vmem:[%s3 + $0x50] sm:$0xf]
    %v1045 = vld [vmem:[%s3 + $0x54] sm:$0xf]
    %v1046 = vld [vmem:[%s3 + $0x58] sm:$0xf]
    %v1047 = vld [vmem:[%s3 + $0x5c] sm:$0xf]
    %v1048 = vld [vmem:[%s3 + $0x60] sm:$0xf]
    %v1049 = vld [vmem:[%s3 + $0x64] sm:$0xf]
    %v1050 = vld [vmem:[%s3 + $0x68] sm:$0xf]
    %v1051 = vld [vmem:[%s3 + $0x6c] sm:$0xf]
    %v1052 = vld [vmem:[%s3 + $0x70] sm:$0xf]
    %v1053 = vld [vmem:[%s3 + $0x74] sm:$0xf]
    %v1054 = vld [vmem:[%s3 + $0x78] sm:$0xf]
    %v1055 = vld [vmem:[%s3 + $0x7c] sm:$0xf]
    %v1056 = vld [vmem:[%s4] sm:$0x1]
    %v1058 = vlaneseq
    %v1059 = vshrl.u32 %v1058, 7
    %v1060 = vsub.s32 0, %v1059
    %v1061 = vrot.slane %v1056, %v1060
    %v1095 = vunpack.c.l.b16 %v1024
    %v1096 = vunpack.c.l.b16 %v1025
    %v1097 = vunpack.c.l.b16 %v1026
    %v1098 = vunpack.c.l.b16 %v1027
    %v1099 = vunpack.c.l.b16 %v1028
    %v1100 = vunpack.c.l.b16 %v1029
    %v1101 = vunpack.c.l.b16 %v1030
    %v1102 = vunpack.c.l.b16 %v1031
    %v1103 = vunpack.c.l.b16 %v1032
    %v1104 = vunpack.c.l.b16 %v1033
    %v1105 = vunpack.c.l.b16 %v1034
    %v1106 = vunpack.c.l.b16 %v1035
    %v1107 = vunpack.c.l.b16 %v1036
    %v1108 = vunpack.c.l.b16 %v1037
    %v1109 = vunpack.c.l.b16 %v1038
    %v1110 = vunpack.c.l.b16 %v1039
    %v1111 = vunpack.c.l.b16 %v1040
    %v1112 = vunpack.c.l.b16 %v1041
    %v1113 = vunpack.c.l.b16 %v1042
    %v1114 = vunpack.c.l.b16 %v1043
    %v1115 = vunpack.c.l.b16 %v1044
    %v1116 = vunpack.c.l.b16 %v1045
    %v1117 = vunpack.c.l.b16 %v1046
    %v1118 = vunpack.c.l.b16 %v1047
    %v1119 = vunpack.c.l.b16 %v1048
    %v1120 = vunpack.c.l.b16 %v1049
    %v1121 = vunpack.c.l.b16 %v1050
    %v1122 = vunpack.c.l.b16 %v1051
    %v1123 = vunpack.c.l.b16 %v1052
    %v1124 = vunpack.c.l.b16 %v1053
    %v1125 = vunpack.c.l.b16 %v1054
    %v1126 = vunpack.c.l.b16 %v1055
    %v1127 = vpack.c.b16 %v1096, %v1095
    %v1128 = vpack.c.b16 %v1098, %v1097
    %v1129 = vpack.c.b16 %v1100, %v1099
    %v1130 = vpack.c.b16 %v1102, %v1101
    %v1131 = vpack.c.b16 %v1104, %v1103
    %v1132 = vpack.c.b16 %v1106, %v1105
    %v1133 = vpack.c.b16 %v1108, %v1107
    %v1134 = vpack.c.b16 %v1110, %v1109
    %v1135 = vpack.c.b16 %v1112, %v1111
    %v1136 = vpack.c.b16 %v1114, %v1113
    %v1137 = vpack.c.b16 %v1116, %v1115
    %v1138 = vpack.c.b16 %v1118, %v1117
    %v1139 = vpack.c.b16 %v1120, %v1119
    %v1140 = vpack.c.b16 %v1122, %v1121
    %v1141 = vpack.c.b16 %v1124, %v1123
    %v1142 = vpack.c.b16 %v1126, %v1125
    %1159 = vmatprep.subr.bf16.mxu0 0
    %1160 = vmatpush1.bf16.msra.mxu0 %v1127
    %1161 = vmatprep.subr.bf16.mxu0 0
    %1162 = vmatpush1.bf16.msra.mxu0 %v1128
    %1163 = vmatprep.subr.bf16.mxu0 0
    %1164 = vmatpush1.bf16.msra.mxu0 %v1129
    %1165 = vmatprep.subr.bf16.mxu0 0
    %1166 = vmatpush1.bf16.msra.mxu0 %v1130
    %1167 = vmatprep.subr.bf16.mxu0 0
    %1168 = vmatpush1.bf16.msra.mxu0 %v1131
    %1169 = vmatprep.subr.bf16.mxu0 0
    %1170 = vmatpush1.bf16.msra.mxu0 %v1132
    %1171 = vmatprep.subr.bf16.mxu0 0
    %1172 = vmatpush1.bf16.msra.mxu0 %v1133
    %1173 = vmatprep.subr.bf16.mxu0 0
    %1174 = vmatpush1.bf16.msra.mxu0 %v1134
    %1175 = vmatprep.subr.bf16.mxu0 0
    %1176 = vmatpush1.bf16.msra.mxu0 %v1135
    %1177 = vmatprep.subr.bf16.mxu0 0
    %1178 = vmatpush1.bf16.msra.mxu0 %v1136
    %1179 = vmatprep.subr.bf16.mxu0 0
    %1180 = vmatpush1.bf16.msra.mxu0 %v1137
    %1181 = vmatprep.subr.bf16.mxu0 0
    %1182 = vmatpush1.bf16.msra.mxu0 %v1138
    %1183 = vmatprep.subr.bf16.mxu0 0
    %1184 = vmatpush1.bf16.msra.mxu0 %v1139
    %1185 = vmatprep.subr.bf16.mxu0 0
    %1186 = vmatpush1.bf16.msra.mxu0 %v1140
    %1187 = vmatprep.subr.bf16.mxu0 0
    %1188 = vmatpush1.bf16.msra.mxu0 %v1141
    %1189 = vmatprep.subr.bf16.mxu0 0
    %1190 = vmatpush1.bf16.msra.mxu0 %v1142
    %1191 = vmatprep.mubr.bf16.mxu0 %v1023
    %1192 = vmatmul.mubr.bf16.gmra.mrb[0].mxu0 %v1022
    %v1193 = vpop.f32.mrb[0].mxu0
    %v1194 = vadd.f32 %v1061, %v1193
    %v1195 = vpop.f32.mrb[0].mxu0
    %v1196 = vpop.f32.mrb[0].mxu0
    %v1197 = vadd.f32 %v1061, %v1196
    %v1198 = vpop.f32.mrb[0].mxu0
    %1199 = vdwg.mxu0
    %v1200 = vmax.f32 %v1194, 0.0
    %v1201 = vmax.f32 %v1197, 0.0
    %v1202 = vpack.c.bf16 %v1201, %v1200
    %v1203 = vld [vmem:[%s5] sm:$0xf]
    %v1204 = vld [vmem:[%s5 + $0x4] sm:$0xf]
    %v1205 = vld [vmem:[%s5 + $0x8] sm:$0xf]
    %v1206 = vld [vmem:[%s5 + $0xc] sm:$0xf]
    %v1207 = vld [vmem:[%s5 + $0x10] sm:$0xf]
    %v1208 = vld [vmem:[%s5 + $0x14] sm:$0xf]
    %v1209 = vld [vmem:[%s5 + $0x18] sm:$0xf]
    %v1210 = vld [vmem:[%s5 + $0x1c] sm:$0xf]
    %v1211 = vld [vmem:[%s6] sm:$0x1]
    %v1213 = vlaneseq
    %v1214 = vshrl.u32 %v1213, 7
    %v1215 = vsub.s32 0, %v1214
    %v1216 = vrot.slane %v1211, %v1215
    %v1226 = vunpack.c.l.b16 %v1203
    %v1227 = vunpack.c.l.b16 %v1204
    %v1228 = vunpack.c.l.b16 %v1205
    %v1229 = vunpack.c.l.b16 %v1206
    %v1230 = vunpack.c.l.b16 %v1207
    %v1231 = vunpack.c.l.b16 %v1208
    %v1232 = vunpack.c.l.b16 %v1209
    %v1233 = vunpack.c.l.b16 %v1210
    %v1234 = vpack.c.b16 %v1227, %v1226
    %v1235 = vpack.c.b16 %v1229, %v1228
    %v1236 = vpack.c.b16 %v1231, %v1230
    %v1237 = vpack.c.b16 %v1233, %v1232
    %vm1242 = vcmask 523264
    %v1244 = vsel %vm1242, %v1202, 0
    %1246 = vmatprep.subr.bf16.mxu0 0
    %1247 = vmatpush1.bf16.msra.mxu0 %v1234
    %1248 = vmatprep.subr.bf16.mxu0 0
    %1249 = vmatpush1.bf16.msra.mxu0 %v1235
    %1250 = vmatprep.subr.bf16.mxu0 0
    %1251 = vmatpush1.bf16.msra.mxu0 %v1236
    %1252 = vmatprep.subr.bf16.mxu0 0
    %1253 = vmatpush1.bf16.msra.mxu0 %v1237
    %1254 = vmatprep.subr.bf16.mxu0 0
    %1255 = vmatpush1.bf16.msra.mxu0 0
    %1256 = vmatprep.subr.bf16.mxu0 0
    %1257 = vmatpush1.bf16.msra.mxu0 0
    %1258 = vmatprep.subr.bf16.mxu0 0
    %1259 = vmatpush1.bf16.msra.mxu0 0
    %1260 = vmatprep.subr.bf16.mxu0 0
    %1261 = vmatpush1.bf16.msra.mxu0 0
    %1262 = vmatprep.subr.bf16.mxu0 0
    %1263 = vmatpush1.bf16.msra.mxu0 0
    %1264 = vmatprep.subr.bf16.mxu0 0
    %1265 = vmatpush1.bf16.msra.mxu0 0
    %1266 = vmatprep.subr.bf16.mxu0 0
    %1267 = vmatpush1.bf16.msra.mxu0 0
    %1268 = vmatprep.subr.bf16.mxu0 0
    %1269 = vmatpush1.bf16.msra.mxu0 0
    %1270 = vmatprep.subr.bf16.mxu0 0
    %1271 = vmatpush1.bf16.msra.mxu0 0
    %1272 = vmatprep.subr.bf16.mxu0 0
    %1273 = vmatpush1.bf16.msra.mxu0 0
    %1274 = vmatprep.subr.bf16.mxu0 0
    %1275 = vmatpush1.bf16.msra.mxu0 0
    %1276 = vmatprep.subr.bf16.mxu0 0
    %1277 = vmatpush1.bf16.msra.mxu0 0
    %1278 = vmatprep.mubr.bf16.mxu0 0
    %1279 = vmatmul.mubr.bf16.gmra.mrb[0].mxu0 %v1244
    %v1280 = vpop.f32.mrb[0].mxu0
    %v1281 = vadd.f32 %v1216, %v1280
    %v1282 = vpop.f32.mrb[0].mxu0
    %v1283 = vpop.f32.mrb[0].mxu0
    %v1284 = vadd.f32 %v1216, %v1283
    %v1285 = vpop.f32.mrb[0].mxu0
    %1286 = vdwg.mxu0
    %v1287 = vmax.f32 %v1281, 0.0
    %v1288 = vmax.f32 %v1284, 0.0
    %vm1289 = vcmask 130048
    %v1290 = vsel %vm1289, %v1287, -inf
    %1291 = vmax.xlane.f32.xlu0 %v1290
    %v1292 = vpop.xlane.xlu0 %1291
    %v1293 = vsel %vm1289, %v1288, -inf
    %1294 = vmax.xlane.f32.xlu0 %v1293
    %v1295 = vpop.xlane.xlu0 %1294
    %v1296 = vsub.f32 %v1287, %v1292
    %v1297 = vsub.f32 %v1288, %v1295
    %v1298 = vmul.f32 %v1296, 1.442695
    %v1299 = vpow.pop %v1298
    %v1300 = vmul.f32 %v1297, 1.442695
    %v1301 = vpow.pop %v1300
    %v1302 = vsel %vm1289, %v1299, 0.0
    %1303 = vadd.xlane.f32.xlu0 %v1302
    %v1304 = vpop.xlane.xlu0 %1303
    %v1305 = vsel %vm1289, %v1301, 0.0
    %1306 = vadd.xlane.f32.xlu0 %v1305
    %v1307 = vpop.xlane.xlu0 %1306
    %v1308 = vrcp.pop %v1304
    %v1309 = vrcp.pop %v1307
    %v1310 = vmul.f32 %v1299, %v1308
    %v1311 = vmul.f32 %v1301, %v1309
    %1312 = vst.msk [vmem:[#allocation5] sm:$0xff] %vm1289, %v1310
    %1313 = vst.msk [vmem:[#allocation5 + $0x8] sm:$0xff] %vm1289, %v1311
    // Predicated region
    $region34: #{tpu_custom_call.1} parent=1 // pred_check
      _
    $region35: #{tpu_custom_call.1} parent=1 // pred_check_branch
      %1315 = sbr.rel (0) target = $region37
    $region36: #{tpu_custom_call.1} parent=1 // pred_region
      %s1317 = ssub.s32 256, 256
      %1318 = vsyncadd [#allocation4], %s1317
      %s1319 = sshll.u32 [#allocation5], 4
      %s1320 = int_to_ptr.vmem [resolvable:$true] %s1319
      %1325 = dma.vmem_to_hbm [thread:$0]  %s1320, 256, %s7, [#allocation4], 128, 128, 8
    $region37: #{tpu_custom_call.1} parent=1 // pred_fallthru
      _
    // Predicated region
    $region38: #{tpu_custom_call.1} parent=1 // pred_check
      _
    $region39: #{tpu_custom_call.1} parent=1 // pred_check_branch
      %1327 = sbr.rel (0) target = $region41
    $region40: #{tpu_custom_call.1} parent=1 // pred_region
      %1328 = dma.done [#allocation4], 256
    $region41: #{tpu_custom_call.1} parent=1 // pred_fallthru
      _
    %1329 = vsyncpa [#allocation3], 1
    %1330 = vsyncpa [#allocation4], 1

</llo_original>
